<compile_context>
chip_gen: v6e
topology: v6e:2x2x1
jax: 0.10.0
libtpu: 0.0.40
codegen_flags: <defaults>
</compile_context>

<pallas_src>
import math

import jax
import jax.numpy as jnp
from jax.experimental import pallas as pl
from jax.experimental.pallas import tpu as pltpu


def _round_up(a, b):
    return (a + b - 1) // b * b


def _pick_tile(n, want):
    """Largest multiple of 128 that divides n and is <= want (n % 128 == 0)."""
    t = max(128, (min(want, n) // 128) * 128)
    while n % t != 0:
        t -= 128
    return t


# ---------------- Stage 1: h = x @ W + b  (computed once) -------------------
def _feature_kernel(x_ref, w_ref, b_ref, h_ref):
    xw = jnp.dot(
        x_ref[...].astype(jnp.bfloat16),
        w_ref[...].astype(jnp.bfloat16),
        preferred_element_type=jnp.float32,
    )
    # b_ref is (1, out_ft) f32: broadcast add, then store bf16 for stage 2.
    h_ref[...] = (xw + b_ref[...]).astype(h_ref.dtype)


# ---------------- Stage 2: out = G @ h  (K-tiled, f32 accumulator) ----------
def _spmm_kernel(g_ref, h_ref, o_ref, acc_ref):
    @pl.when(pl.program_id(1) == 0)
    def _():
        acc_ref[...] = jnp.zeros_like(acc_ref)

    acc_ref[...] += jnp.dot(
        g_ref[...].astype(jnp.bfloat16),  # in-register cast: G streamed once, f32
        h_ref[...],
        preferred_element_type=jnp.float32,
    )

    @pl.when(pl.program_id(1) == pl.num_programs(1) - 1)
    def _():
        o_ref[...] = acc_ref[...].astype(o_ref.dtype)


def hgnn_conv(x, G, weight, bias=None, *, tm=256, tk=512, tmh=256,
              vmem_limit_bytes=48 * 1024 * 1024):
    N, in_ft = x.shape
    out_ft = weight.shape[1]
    assert G.shape == (N, N)
    out_dtype = x.dtype

    # Pad the node dimension up to a multiple of 128 (zero rows/cols are exact:
    # padded G columns are zero -> no contribution; padded output rows sliced).
    Np = _round_up(N, 128)
    if Np != N:
        x = jnp.pad(x, ((0, Np - N), (0, 0)))
        G = jnp.pad(G, ((0, Np - N), (0, Np - N)))

    tm = _pick_tile(Np, tm)
    tk = _pick_tile(Np, tk)
    tmh = _pick_tile(Np, tmh)

    x_f = x.astype(jnp.float32)
    w_f = weight.astype(jnp.float32)
    g_f = G.astype(jnp.float32)
    if bias is None:
        b2 = jnp.zeros((1, out_ft), jnp.float32)
    else:
        b2 = bias.reshape(1, out_ft).astype(jnp.float32)

    # ---- Stage 1: h = x @ W + b  (bf16 output) ------------------------------
    h = pl.pallas_call(
        _feature_kernel,
        out_shape=jax.ShapeDtypeStruct((Np, out_ft), jnp.bfloat16),
        grid_spec=pltpu.PrefetchScalarGridSpec(
            num_scalar_prefetch=0,
            grid=(Np // tmh,),
            in_specs=[
                pl.BlockSpec((tmh, in_ft), lambda i: (i, 0)),     # x row tile
                pl.BlockSpec((in_ft, out_ft), lambda i: (0, 0)),  # W (full)
                pl.BlockSpec((1, out_ft), lambda i: (0, 0)),      # b (full)
            ],
            out_specs=pl.BlockSpec((tmh, out_ft), lambda i: (i, 0)),
        ),
        compiler_params=pltpu.CompilerParams(
            dimension_semantics=("parallel",),
            vmem_limit_bytes=vmem_limit_bytes,
        ),
    )(x_f, w_f, b2)

    # ---- Stage 2: out = G @ h  (K-tiled, carried f32 accumulator) -----------
    out = pl.pallas_call(
        _spmm_kernel,
        out_shape=jax.ShapeDtypeStruct((Np, out_ft), out_dtype),
        grid_spec=pltpu.PrefetchScalarGridSpec(
            num_scalar_prefetch=0,
            grid=(Np // tm, Np // tk),
            in_specs=[
                pl.BlockSpec((tm, tk), lambda i, k: (i, k)),      # G tile (f32)
                pl.BlockSpec((tk, out_ft), lambda i, k: (k, 0)),  # h k-slab (bf16)
            ],
            out_specs=pl.BlockSpec((tm, out_ft), lambda i, k: (i, 0)),
            scratch_shapes=[pltpu.VMEM((tm, out_ft), jnp.float32)],
        ),
        compiler_params=pltpu.CompilerParams(
            dimension_semantics=("parallel", "arbitrary"),
            vmem_limit_bytes=vmem_limit_bytes,
        ),
    )(g_f, h)

    return out[:N] if Np != N else out


if __name__ == "__main__":
    # Small, deterministic problem sizes.
    N, in_ft, out_ft = 256, 64, 128

    key = jax.random.PRNGKey(0)
    kx, kg, kw, kb = jax.random.split(key, 4)

    # Deterministic parameter init mimicking HGNN_conv.reset_parameters:
    # uniform(-stdv, stdv) with stdv = 1/sqrt(out_ft).
    stdv = 1.0 / math.sqrt(out_ft)
    weight = jax.random.uniform(kw, (in_ft, out_ft), jnp.float32, -stdv, stdv)
    bias = jax.random.uniform(kb, (out_ft,), jnp.float32, -stdv, stdv)

    x = jax.random.normal(kx, (N, in_ft), jnp.float32)
    # G: dense hypergraph Laplacian-like matrix (sparse-ish pattern, stored dense).
    G = jax.random.uniform(kg, (N, N), jnp.float32)
    G = jnp.where(G > 0.9, G, 0.0)

    # Small tiles so the k-accumulation path (grid = 2x2) is exercised.
    out = hgnn_conv(x, G, weight, bias, tm=128, tk=128, tmh=128)
    out = jax.block_until_ready(out)

    # Pure-JAX f32 reference; loose tolerance because the kernel multiplies
    # in bf16 on the MXU (f32 accumulation).
    ref = G @ (x @ weight + bias)
    assert out.shape == (N, out_ft)
    assert jnp.allclose(out, ref, atol=5e-2, rtol=5e-2), "mismatch vs reference"

    print("KERNEL_OK")
</pallas_src>

<mosaic_0001>
module attributes {stable_mosaic.version = 11 : i64} {
  func.func @_feature_kernel(%arg0: i32, %arg1: memref<128x64xf32, #tpu.memory_space<vmem>>, %arg2: memref<64x128xf32, #tpu.memory_space<vmem>>, %arg3: memref<1x128xf32, #tpu.memory_space<vmem>>, %arg4: memref<128x128xbf16, #tpu.memory_space<vmem>>) attributes {dimension_semantics = [#tpu.dimension_semantics<parallel>], iteration_bounds = array<i64: 2>, scalar_prefetch = 0 : i64, scratch_operands = 0 : i64, tpu.core_type = #tpu.core_type<tc>, window_params = [{transform_indices = @transform_0, window_bounds = array<i64: 128, 64>}, {pipeline_mode = #tpu.pipeline_mode<synchronous>, transform_indices = @transform_1, window_bounds = array<i64: 64, 128>}, {pipeline_mode = #tpu.pipeline_mode<synchronous>, transform_indices = @transform_2, window_bounds = array<i64: 1, 128>}, {transform_indices = @transform_3, window_bounds = array<i64: 128, 128>}]} {
    %c0 = arith.constant 0 : index
    %c0_0 = arith.constant 0 : index
    %0 = vector.load %arg1[%c0, %c0_0] : memref<128x64xf32, #tpu.memory_space<vmem>>, vector<128x64xf32>
    %1 = arith.truncf %0 : vector<128x64xf32> to vector<128x64xbf16>
    %c0_1 = arith.constant 0 : index
    %c0_2 = arith.constant 0 : index
    %2 = vector.load %arg2[%c0_1, %c0_2] : memref<64x128xf32, #tpu.memory_space<vmem>>, vector<64x128xf32>
    %3 = arith.truncf %2 : vector<64x128xf32> to vector<64x128xbf16>
    %cst = arith.constant dense<0.000000e+00> : vector<128x128xf32>
    %4 = tpu.matmul %1, %3, %cst {dimension_numbers = #tpu.dot_dimension_numbers<[1], [0], [0], [1], [0, 0, 1, 1], [], []>} : vector<128x64xbf16>, vector<64x128xbf16>, vector<128x128xf32> -> vector<128x128xf32>
    %c0_3 = arith.constant 0 : index
    %c0_4 = arith.constant 0 : index
    %5 = vector.load %arg3[%c0_3, %c0_4] : memref<1x128xf32, #tpu.memory_space<vmem>>, vector<1x128xf32>
    %6 = vector.broadcast %5 : vector<1x128xf32> to vector<128x128xf32>
    %7 = arith.addf %4, %6 : vector<128x128xf32>
    %8 = arith.truncf %7 : vector<128x128xf32> to vector<128x128xbf16>
    %c0_5 = arith.constant 0 : index
    %c0_6 = arith.constant 0 : index
    %9 = vector.load %arg4[%c0_5, %c0_6] : memref<128x128xbf16, #tpu.memory_space<vmem>>, vector<128x128xbf16>
    tpu.vector_store %arg4[%c0_5, %c0_6], %8 {strides = array<i32>} : memref<128x128xbf16, #tpu.memory_space<vmem>>, vector<128x128xbf16>,
    return
  }
  func.func @transform_0(%arg0: i32) -> (i32, i32) {
    %c0_i32 = arith.constant 0 : i32
    %c0_i32_0 = arith.constant 0 : i32
    return %arg0, %c0_i32 : i32, i32
  }
  func.func @transform_1(%arg0: i32) -> (i32, i32) {
    %c0_i32 = arith.constant 0 : i32
    %c0_i32_0 = arith.constant 0 : i32
    %c0_i32_1 = arith.constant 0 : i32
    return %c0_i32, %c0_i32_0 : i32, i32
  }
  func.func @transform_2(%arg0: i32) -> (i32, i32) {
    %c0_i32 = arith.constant 0 : i32
    %c0_i32_0 = arith.constant 0 : i32
    %c0_i32_1 = arith.constant 0 : i32
    return %c0_i32, %c0_i32_0 : i32, i32
  }
  func.func @transform_3(%arg0: i32) -> (i32, i32) {
    %c0_i32 = arith.constant 0 : i32
    %c0_i32_0 = arith.constant 0 : i32
    return %arg0, %c0_i32 : i32, i32
  }
}

</mosaic_0001>

<llo_original>
// kernel: tpu_custom_call.1
$region0: #{tpu_custom_call.1}
  #allocation0 [shape = 'u32[]', space=smem, size = 0x4, offset = 0x4, fixed_abs, tag = 'smem constant byte address 0x4 - core index']
  #allocation1 [shape = 'u32[144,128]{1,0:T(1,128)}', space=vmem, size = 0x12000, scoped, tag = 'internal scratch']
  %s0 = inlined_call_operand.vmem [shape: f32[256,64], index: 0, kind: input, shape index: {}]
  %s1 = inlined_call_operand.vmem [shape: f32[64,128], index: 1, kind: input, shape index: {}]
  %s2 = inlined_call_operand.vmem [shape: f32[1,128], index: 2, kind: input, shape index: {}]
  %s3 = inlined_call_operand.hbm [shape: bf16[256,128], index: 3, kind: output, shape index: {}]
  %s4 = sld [smem:[#allocation0]]
  $region45: #{tpu_custom_call.1} parent=0
    _
  %s6 = ssub.s32 1, %s4
  %s7 = scalar_select 0, %s6, %s4
  $region1: #{tpu_custom_call.1} parent=0
    #allocation2 [shape = 'u8[65536]{0}', space=vmem, size = 0x10000, scoped, tag = 'output window, operand 0']
    #allocation3 [shape = 's32[2]{0}', space=sflag, size = 0x8, scoped, tag = 'scoped memory for tpu_custom_call.1']
    %8 = vsyncpa [#allocation3], 0
    %s9 = scalar_lea.sflag [#allocation3], 1
    %10 = vsyncpa %s9, 0
    loop: start=0, step=1, limit=4
    $region2: #{tpu_custom_call.1} parent=1 // loop_pre_header
      _
    $region3: #{tpu_custom_call.1} parent=1 // loop_header
      %s12 = sphi 0, %s16
      %p13 = scmp.ge.s32.totalorder %s12, 4
      %s22 = sphi 0, %s24
      %s25 = sphi 0, %s22
      %s26 = sphi 0, %s25
      %s42 = sphi 0, %s26
      %s46 = sphi 0, %s46
      %s48 = sphi 0, %s46
      %s49 = sphi 0, %s48
      %s63 = sphi 0, %s49
      %s67 = sphi 0, %s67
      %s69 = sphi 0, %s67
      %s70 = sphi 0, %s69
      %s84 = sphi 0, %s70
      %s90 = sphi 0, %s92
      %s93 = sphi 0, %s90
      %s94 = sphi 0, %s93
      %s110 = sphi 0, %s94
    $region4: #{tpu_custom_call.1} parent=1 // loop_header_branch
      %15 = sbr.rel (%p13) target = $region8
    $region5: #{tpu_custom_call.1} parent=1 // loop_body
      %s17 = ssub.s32 %s12, 1
      %s18 = ssub.s32 %s12, 2
      %s19 = sadd.s32 %s12, 1
      %s20 = ssub.s32 %s12, %s19
      %p21 = scmp.eq.s32.totalorder %s20, 0
      %s23 = sadd.s32 %s22, 1
      %s24 = scalar_select %p21, %s22, %s23
      %p27 = pneg %p21
      %p28 = scmp.eq.s32.totalorder %s12, 1
      %p29 = por %p27, %p28
      %p30 = scmp.ne.s32.totalorder %s22, %s25
      %p31 = scmp.eq.s32.totalorder %s12, 0
      %p32 = por %p30, %p31
      %p33 = scmp.ne.s32.totalorder %s22, %s25
      %p34 = scmp.eq.s32.totalorder %s17, 1
      %p35 = por %p33, %p34
      %p36 = scmp.ne.s32.totalorder %s25, %s26
      %p37 = scmp.eq.s32.totalorder %s17, 0
      %p38 = por %p36, %p37
      %p39 = scmp.ne.s32.totalorder %s25, %s26
      %p40 = scmp.eq.s32.totalorder %s18, 1
      %p41 = por %p39, %p40
      %p43 = scmp.ne.s32.totalorder %s26, %s42
      %p44 = scmp.eq.s32.totalorder %s18, 0
      %p45 = por %p43, %p44
      %s47 = sadd.s32 %s46, 1
      %p50 = scmp.eq.s32.totalorder %s12, 1
      %p51 = scmp.ne.s32.totalorder %s46, %s48
      %p52 = scmp.eq.s32.totalorder %s12, 0
      %p53 = por %p51, %p52
      %p54 = scmp.ne.s32.totalorder %s46, %s48
      %p55 = scmp.eq.s32.totalorder %s17, 1
      %p56 = por %p54, %p55
      %p57 = scmp.ne.s32.totalorder %s48, %s49
      %p58 = scmp.eq.s32.totalorder %s17, 0
      %p59 = por %p57, %p58
      %p60 = scmp.ne.s32.totalorder %s48, %s49
      %p61 = scmp.eq.s32.totalorder %s18, 1
      %p62 = por %p60, %p61
      %p64 = scmp.ne.s32.totalorder %s49, %s63
      %p65 = scmp.eq.s32.totalorder %s18, 0
      %p66 = por %p64, %p65
      %s68 = sadd.s32 %s67, 1
      %p71 = scmp.eq.s32.totalorder %s12, 1
      %p72 = scmp.ne.s32.totalorder %s67, %s69
      %p73 = scmp.eq.s32.totalorder %s12, 0
      %p74 = por %p72, %p73
      %p75 = scmp.ne.s32.totalorder %s67, %s69
      %p76 = scmp.eq.s32.totalorder %s17, 1
      %p77 = por %p75, %p76
      %p78 = scmp.ne.s32.totalorder %s69, %s70
      %p79 = scmp.eq.s32.totalorder %s17, 0
      %p80 = por %p78, %p79
      %p81 = scmp.ne.s32.totalorder %s69, %s70
      %p82 = scmp.eq.s32.totalorder %s18, 1
      %p83 = por %p81, %p82
      %p85 = scmp.ne.s32.totalorder %s70, %s84
      %p86 = scmp.eq.s32.totalorder %s18, 0
      %p87 = por %p85, %p86
      %s88 = ssub.s32 %s12, %s19
      %p89 = scmp.eq.s32.totalorder %s88, 0
      %s91 = sadd.s32 %s90, 1
      %s92 = scalar_select %p89, %s90, %s91
      %p95 = pneg %p89
      %p96 = scmp.eq.s32.totalorder %s12, 1
      %p97 = por %p95, %p96
      %p98 = scmp.ne.s32.totalorder %s90, %s93
      %p99 = scmp.eq.s32.totalorder %s12, 0
      %p100 = por %p98, %p99
      %p101 = scmp.ne.s32.totalorder %s90, %s93
      %p102 = scmp.eq.s32.totalorder %s17, 1
      %p103 = por %p101, %p102
      %p104 = scmp.ne.s32.totalorder %s93, %s94
      %p105 = scmp.eq.s32.totalorder %s17, 0
      %p106 = por %p104, %p105
      %p107 = scmp.ne.s32.totalorder %s93, %s94
      %p108 = scmp.eq.s32.totalorder %s18, 1
      %p109 = por %p107, %p108
      %p111 = scmp.ne.s32.totalorder %s94, %s110
      %p112 = scmp.eq.s32.totalorder %s18, 0
      %p113 = por %p111, %p112
      %p114 = scmp.le.s32.totalorder 1, %s12
      %p115 = scmp.lt.s32.totalorder %s12, 3
      %p116 = pnand %p114, %p115
      %p117 = pneg %p116
      // Predicated region
      $region9: #{tpu_custom_call.1} parent=5 // pred_check
        _
      $region10: #{tpu_custom_call.1} parent=5 // pred_check_branch
        %119 = sbr.rel (%p116) target = $region12
      $region11: #{tpu_custom_call.1} parent=5 // pred_region
        %s120 = ssub.s32 %s12, 1
        // Predicated region
        $region13: #{tpu_custom_call.1} parent=11 // pred_check
          %p121 = pneg %p59
        $region14: #{tpu_custom_call.1} parent=11 // pred_check_branch
          %123 = sbr.rel (%p121) target = $region16
        $region15: #{tpu_custom_call.1} parent=11 // pred_region
          _
        $region16: #{tpu_custom_call.1} parent=11 // pred_fallthru
          _
        // Predicated region
        $region17: #{tpu_custom_call.1} parent=11 // pred_check
          %p124 = pneg %p80
        $region18: #{tpu_custom_call.1} parent=11 // pred_check_branch
          %126 = sbr.rel (%p124) target = $region20
        $region19: #{tpu_custom_call.1} parent=11 // pred_region
          _
        $region20: #{tpu_custom_call.1} parent=11 // pred_fallthru
          _
      $region12: #{tpu_custom_call.1} parent=5 // pred_fallthru
        _
      %p127 = scmp.lt.s32.totalorder %s12, 2
      // Predicated region
      $region21: #{tpu_custom_call.1} parent=5 // pred_check
        %p128 = pneg %p127
      $region22: #{tpu_custom_call.1} parent=5 // pred_check_branch
        %130 = sbr.rel (%p128) target = $region24
      $region23: #{tpu_custom_call.1} parent=5 // pred_region
        // Predicated region
        $region25: #{tpu_custom_call.1} parent=23 // pred_check
          %p131 = pneg %p32
        $region26: #{tpu_custom_call.1} parent=23 // pred_check_branch
          %133 = sbr.rel (%p131) target = $region28
        $region27: #{tpu_custom_call.1} parent=23 // pred_region
          %s134 = smul.u32 16, %s12
          %p135 = scmp.lt.s32.totalorder %s134, 31
          %s136 = scalar_select %p135, %s134, 31
          %s137 = smul.addr %s136, 8
          %s138 = scalar_lea.vmem %s0, %s137
          %s139 = smul.u32 16, %s12
        $region28: #{tpu_custom_call.1} parent=23 // pred_fallthru
          _
      $region24: #{tpu_custom_call.1} parent=5 // pred_fallthru
        _
      %p140 = scmp.le.s32.totalorder 1, %s12
      %p141 = scmp.lt.s32.totalorder %s12, 3
      %p142 = pnand %p140, %p141
      %p143 = pneg %p142
      // Predicated region
      $region29: #{tpu_custom_call.1} parent=5 // pred_check
        _
      $region30: #{tpu_custom_call.1} parent=5 // pred_check_branch
        %145 = sbr.rel (%p142) target = $region32
      $region31: #{tpu_custom_call.1} parent=5 // pred_region
        %s146 = ssub.s32 %s12, 1
        %s147 = smul.u32 16, %s17
        %p148 = scmp.lt.s32.totalorder %s147, 31
        %s149 = scalar_select %p148, %s147, 31
        %s150 = smul.addr %s149, 8
        %s151 = scalar_lea.vmem %s0, %s150
        %p152 = pneg %p38
        %p153 = pneg %p35
        %p154 = pneg %p59
        %p155 = pneg %p56
        %p156 = pneg %p80
        %p157 = pneg %p77
        %p158 = pneg %p106
        %p159 = pneg %p103
        %s160 = sand.u32 %s93, 1
        %s161 = scalar_lea.sflag [#allocation3], %s160
        %s162 = sand.u32 %s93, 1
        %s163 = smul.addr %s162, 64
        %s164 = scalar_lea.vmem [#allocation2], %s163
        %s165 = smul.u32 16, %s17
        %p166 = scmp.lt.s32.totalorder %s165, 31
        %s167 = scalar_select %p166, %s165, 31
        %s168 = smul.addr %s167, 8
        %s169 = scalar_lea.vmem %s0, %s168
        %s170 = smul.u32 16, %s17
        %s171 = smul.u32 16, %s17
        %v173 = vld [vmem:[%s169] sm:$0xff]
        %v174 = vld [vmem:[%s169 + $0x8] sm:$0xff]
        %v175 = vld [vmem:[%s169 + $0x10] sm:$0xff]
        %v176 = vld [vmem:[%s169 + $0x18] sm:$0xff]
        %v177 = vld [vmem:[%s169 + $0x20] sm:$0xff]
        %v178 = vld [vmem:[%s169 + $0x28] sm:$0xff]
        %v179 = vld [vmem:[%s169 + $0x30] sm:$0xff]
        %v180 = vld [vmem:[%s169 + $0x38] sm:$0xff]
        %v181 = vld [vmem:[%s169 + $0x40] sm:$0xff]
        %v182 = vld [vmem:[%s169 + $0x48] sm:$0xff]
        %v183 = vld [vmem:[%s169 + $0x50] sm:$0xff]
        %v184 = vld [vmem:[%s169 + $0x58] sm:$0xff]
        %v185 = vld [vmem:[%s169 + $0x60] sm:$0xff]
        %v186 = vld [vmem:[%s169 + $0x68] sm:$0xff]
        %v187 = vld [vmem:[%s169 + $0x70] sm:$0xff]
        %v188 = vld [vmem:[%s169 + $0x78] sm:$0xff]
        %v189 = vpack.c.bf16 %v174, %v173
        %v190 = vpack.c.bf16 %v176, %v175
        %v191 = vpack.c.bf16 %v178, %v177
        %v192 = vpack.c.bf16 %v180, %v179
        %v193 = vpack.c.bf16 %v182, %v181
        %v194 = vpack.c.bf16 %v184, %v183
        %v195 = vpack.c.bf16 %v186, %v185
        %v196 = vpack.c.bf16 %v188, %v187
        %v197 = vld [vmem:[%s1] sm:$0xff]
        %v198 = vld [vmem:[%s1 + $0x8] sm:$0xff]
        %v199 = vld [vmem:[%s1 + $0x10] sm:$0xff]
        %v200 = vld [vmem:[%s1 + $0x18] sm:$0xff]
        %v201 = vld [vmem:[%s1 + $0x20] sm:$0xff]
        %v202 = vld [vmem:[%s1 + $0x28] sm:$0xff]
        %v203 = vld [vmem:[%s1 + $0x30] sm:$0xff]
        %v204 = vld [vmem:[%s1 + $0x38] sm:$0xff]
        %v205 = vpack.c.bf16 %v198, %v197
        %v206 = vpack.c.bf16 %v200, %v199
        %v207 = vpack.c.bf16 %v202, %v201
        %v208 = vpack.c.bf16 %v204, %v203
        %v209 = vld [vmem:[%s2] sm:$0x1]
        %v211 = vlaneseq
        %v212 = vshrl.u32 %v211, 7
        %v213 = vsub.s32 0, %v212
        %v214 = vrot.slane %v209, %v213
        %vm216 = vcmask 523264
        %v218 = vsel %vm216, %v189, 0
        %v221 = vsel %vm216, %v190, 0
        %v224 = vsel %vm216, %v191, 0
        %v227 = vsel %vm216, %v192, 0
        %v230 = vsel %vm216, %v193, 0
        %v233 = vsel %vm216, %v194, 0
        %v236 = vsel %vm216, %v195, 0
        %v239 = vsel %vm216, %v196, 0
        %241 = vmatprep.subr.bf16.mxu0 0
        %242 = vmatpush1.bf16.msra.mxu0 0
        %243 = vmatprep.subr.bf16.mxu0 0
        %244 = vmatpush1.bf16.msra.mxu0 0
        %245 = vmatprep.subr.bf16.mxu0 0
        %246 = vmatpush1.bf16.msra.mxu0 0
        %247 = vmatprep.subr.bf16.mxu0 0
        %248 = vmatpush1.bf16.msra.mxu0 0
        %249 = vmatprep.subr.bf16.mxu0 0
        %250 = vmatpush1.bf16.msra.mxu0 %v208
        %251 = vmatprep.subr.bf16.mxu0 0
        %252 = vmatpush1.bf16.msra.mxu0 %v207
        %253 = vmatprep.subr.bf16.mxu0 0
        %254 = vmatpush1.bf16.msra.mxu0 %v206
        %255 = vmatprep.subr.bf16.mxu0 0
        %256 = vmatpush1.bf16.msra.mxu0 %v205
        %257 = vmatprep.subr.bf16.mxu0 0
        %258 = vmatpush2.bf16.msra.mxu0 0
        %259 = vmatprep.subr.bf16.mxu0 0
        %260 = vmatpush2.bf16.msra.mxu0 0
        %261 = vmatprep.subr.bf16.mxu0 0
        %262 = vmatpush2.bf16.msra.mxu0 0
        %263 = vmatprep.subr.bf16.mxu0 0
        %264 = vmatpush2.bf16.msra.mxu0 0
        %265 = vmatprep.subr.bf16.mxu0 0
        %266 = vmatpush2.bf16.msra.mxu0 0
        %267 = vmatprep.subr.bf16.mxu0 0
        %268 = vmatpush2.bf16.msra.mxu0 0
        %269 = vmatprep.subr.bf16.mxu0 0
        %270 = vmatpush2.bf16.msra.mxu0 0
        %271 = vmatprep.subr.bf16.mxu0 0
        %272 = vmatpush2.bf16.msra.mxu0 0
        %273 = vmatprep.mubr.bf16.mxu0 0
        %274 = vmatmul.mubr.bf16.gmra.mxu0 %v218
        %v275 = vpop.f32.mrf.mxu0
        %v276 = vadd.f32 %v214, %v275
        %v277 = vpop.f32.mrf.mxu0
        %v278 = vpop.f32.mrf.mxu0
        %v279 = vadd.f32 %v214, %v278
        %v280 = vpop.f32.mrf.mxu0
        %281 = vmatprep.mubr.bf16.mxu0 0
        %282 = vmatmul.mubr.bf16.gmra.mxu0 %v221
        %v283 = vpop.f32.mrf.mxu0
        %v284 = vadd.f32 %v214, %v283
        %v285 = vpop.f32.mrf.mxu0
        %v286 = vpop.f32.mrf.mxu0
        %v287 = vadd.f32 %v214, %v286
        %v288 = vpop.f32.mrf.mxu0
        %289 = vmatprep.mubr.bf16.mxu0 0
        %290 = vmatmul.mubr.bf16.gmra.mxu0 %v224
        %v291 = vpop.f32.mrf.mxu0
        %v292 = vadd.f32 %v214, %v291
        %v293 = vpop.f32.mrf.mxu0
        %v294 = vpop.f32.mrf.mxu0
        %v295 = vadd.f32 %v214, %v294
        %v296 = vpop.f32.mrf.mxu0
        %297 = vmatprep.mubr.bf16.mxu0 0
        %298 = vmatmul.mubr.bf16.gmra.mxu0 %v227
        %v299 = vpop.f32.mrf.mxu0
        %v300 = vadd.f32 %v214, %v299
        %v301 = vpop.f32.mrf.mxu0
        %v302 = vpop.f32.mrf.mxu0
        %v303 = vadd.f32 %v214, %v302
        %v304 = vpop.f32.mrf.mxu0
        %305 = vmatprep.mubr.bf16.mxu0 0
        %306 = vmatmul.mubr.bf16.gmra.mxu0 %v230
        %v307 = vpop.f32.mrf.mxu0
        %v308 = vadd.f32 %v214, %v307
        %v309 = vpop.f32.mrf.mxu0
        %v310 = vpop.f32.mrf.mxu0
        %v311 = vadd.f32 %v214, %v310
        %v312 = vpop.f32.mrf.mxu0
        %313 = vmatprep.mubr.bf16.mxu0 0
        %314 = vmatmul.mubr.bf16.gmra.mxu0 %v233
        %v315 = vpop.f32.mrf.mxu0
        %v316 = vadd.f32 %v214, %v315
        %v317 = vpop.f32.mrf.mxu0
        %v318 = vpop.f32.mrf.mxu0
        %v319 = vadd.f32 %v214, %v318
        %v320 = vpop.f32.mrf.mxu0
        %321 = vmatprep.mubr.bf16.mxu0 0
        %322 = vmatmul.mubr.bf16.gmra.mxu0 %v236
        %v323 = vpop.f32.mrf.mxu0
        %v324 = vadd.f32 %v214, %v323
        %v325 = vpop.f32.mrf.mxu0
        %v326 = vpop.f32.mrf.mxu0
        %v327 = vadd.f32 %v214, %v326
        %v328 = vpop.f32.mrf.mxu0
        %329 = vmatprep.mubr.bf16.mxu0 0
        %330 = vmatmul.mubr.bf16.gmra.mxu0 %v239
        %v331 = vpop.f32.mrf.mxu0
        %v332 = vadd.f32 %v214, %v331
        %v333 = vpop.f32.mrf.mxu0
        %v334 = vpop.f32.mrf.mxu0
        %v335 = vadd.f32 %v214, %v334
        %v336 = vpop.f32.mrf.mxu0
        %337 = vdwg.mxu0
        %v338 = vpack.c.bf16 %v279, %v276
        %v339 = vpack.c.bf16 %v287, %v284
        %v340 = vpack.c.bf16 %v295, %v292
        %v341 = vpack.c.bf16 %v303, %v300
        %v342 = vpack.c.bf16 %v311, %v308
        %v343 = vpack.c.bf16 %v319, %v316
        %v344 = vpack.c.bf16 %v327, %v324
        %v345 = vpack.c.bf16 %v335, %v332
        %v354 = vunpack.c.l.b16 %v338
        %v355 = vunpack.c.h.b16 %v338
        %v356 = vunpack.c.l.b16 %v339
        %v357 = vunpack.c.h.b16 %v339
        %v358 = vunpack.c.l.b16 %v340
        %v359 = vunpack.c.h.b16 %v340
        %v360 = vunpack.c.l.b16 %v341
        %v361 = vunpack.c.h.b16 %v341
        %v362 = vunpack.c.l.b16 %v342
        %v363 = vunpack.c.h.b16 %v342
        %v364 = vunpack.c.l.b16 %v343
        %v365 = vunpack.c.h.b16 %v343
        %v366 = vunpack.c.l.b16 %v344
        %v367 = vunpack.c.h.b16 %v344
        %v368 = vunpack.c.l.b16 %v345
        %v369 = vunpack.c.h.b16 %v345
        %v370 = vpack.c.b16 %v354, %v354
        %v371 = vpack.c.b16 %v355, %v355
        %v372 = vpack.c.b16 %v356, %v356
        %v373 = vpack.c.b16 %v357, %v357
        %v374 = vpack.c.b16 %v358, %v358
        %v375 = vpack.c.b16 %v359, %v359
        %v376 = vpack.c.b16 %v360, %v360
        %v377 = vpack.c.b16 %v361, %v361
        %v378 = vpack.c.b16 %v362, %v362
        %v379 = vpack.c.b16 %v363, %v363
        %v380 = vpack.c.b16 %v364, %v364
        %v381 = vpack.c.b16 %v365, %v365
        %v382 = vpack.c.b16 %v366, %v366
        %v383 = vpack.c.b16 %v367, %v367
        %v384 = vpack.c.b16 %v368, %v368
        %v385 = vpack.c.b16 %v369, %v369
        %402 = vst [vmem:[%s164] sm:$0xf] %v370
        %403 = vst [vmem:[%s164 + $0x4] sm:$0xf] %v371
        %404 = vst [vmem:[%s164 + $0x8] sm:$0xf] %v372
        %405 = vst [vmem:[%s164 + $0xc] sm:$0xf] %v373
        %406 = vst [vmem:[%s164 + $0x10] sm:$0xf] %v374
        %407 = vst [vmem:[%s164 + $0x14] sm:$0xf] %v375
        %408 = vst [vmem:[%s164 + $0x18] sm:$0xf] %v376
        %409 = vst [vmem:[%s164 + $0x1c] sm:$0xf] %v377
        %410 = vst [vmem:[%s164 + $0x20] sm:$0xf] %v378
        %411 = vst [vmem:[%s164 + $0x24] sm:$0xf] %v379
        %412 = vst [vmem:[%s164 + $0x28] sm:$0xf] %v380
        %413 = vst [vmem:[%s164 + $0x2c] sm:$0xf] %v381
        %414 = vst [vmem:[%s164 + $0x30] sm:$0xf] %v382
        %415 = vst [vmem:[%s164 + $0x34] sm:$0xf] %v383
        %416 = vst [vmem:[%s164 + $0x38] sm:$0xf] %v384
        %417 = vst [vmem:[%s164 + $0x3c] sm:$0xf] %v385
        %s418 = sand.u32 %s93, 1
        %s419 = scalar_lea.sflag [#allocation3], %s418
        %s420 = sand.u32 %s93, 1
        %s421 = smul.addr %s420, 64
        %s422 = scalar_lea.vmem [#allocation2], %s421
        // Predicated region
        $region33: #{tpu_custom_call.1} parent=31 // pred_check
          %p423 = pneg %p103
        $region34: #{tpu_custom_call.1} parent=31 // pred_check_branch
          %425 = sbr.rel (%p423) target = $region36
        $region35: #{tpu_custom_call.1} parent=31 // pred_region
          %s426 = smul.u32 16, %s17
          %s428 = ssub.s32 1024, 1024
          %429 = vsyncadd %s419, %s428
          %s430 = smul.addr %s426, 64
          %s431 = scalar_lea.hbm %s3, %s430
          %s432 = sshll.u32 %s422, 4
          %s433 = int_to_ptr.vmem [resolvable:$true] %s432
          %438 = dma.vmem_to_hbm [thread:$0]  %s433, 1024, %s431, %s419, 64, 64, 4
        $region36: #{tpu_custom_call.1} parent=31 // pred_fallthru
          _
      $region32: #{tpu_custom_call.1} parent=5 // pred_fallthru
        _
      %p439 = scmp.le.s32.totalorder 2, %s12
      // Predicated region
      $region37: #{tpu_custom_call.1} parent=5 // pred_check
        %p440 = pneg %p439
      $region38: #{tpu_custom_call.1} parent=5 // pred_check_branch
        %442 = sbr.rel (%p440) target = $region40
      $region39: #{tpu_custom_call.1} parent=5 // pred_region
        %s443 = ssub.s32 %s12, 2
        // Predicated region
        $region41: #{tpu_custom_call.1} parent=39 // pred_check
          %p444 = pneg %p109
        $region42: #{tpu_custom_call.1} parent=39 // pred_check_branch
          %446 = sbr.rel (%p444) target = $region44
        $region43: #{tpu_custom_call.1} parent=39 // pred_region
          %s447 = sand.u32 %s94, 1
          %s448 = scalar_lea.sflag [#allocation3], %s447
          %s449 = sand.u32 %s94, 1
          %s450 = smul.addr %s449, 64
          %s451 = scalar_lea.vmem [#allocation2], %s450
          %452 = dma.done %s448, 1024
        $region44: #{tpu_custom_call.1} parent=39 // pred_fallthru
          _
      $region40: #{tpu_custom_call.1} parent=5 // pred_fallthru
        _
    $region6: #{tpu_custom_call.1} parent=1 // loop_footer
      %s16 = sadd.s32 1, %s12
    $region7: #{tpu_custom_call.1} parent=1 // loop_footer_branch
      %11 = sbr.rel target = $region3
    $region8: #{tpu_custom_call.1} parent=1 // loop_exit
      _
    %453 = vsyncpa [#allocation3], 1
    %s454 = scalar_lea.sflag [#allocation3], 1
    %455 = vsyncpa %s454, 1

</llo_original>
